<compile_context>
chip_gen: v5e
topology: v5e:2x2
jax: 0.10.0
libtpu: 0.0.40
codegen_flags: <defaults>
</compile_context>

<pallas_src>
import math
import jax
import jax.numpy as jnp
from jax.experimental import pallas as pl
from jax.experimental.pallas import tpu as pltpu


def _round_up(x, m):
    return ((x + m - 1) // m) * m


def attention_out_kernel(a_ref, w_ref, b_ref, o_ref):
    # One fused MXU matmul over the concatenated K axis; f32 accumulation,
    # single f32 bias add, cast once to the output dtype.
    acc = jnp.dot(a_ref[...], w_ref[...], preferred_element_type=jnp.float32)
    o_ref[...] = (acc + b_ref[...]).astype(o_ref.dtype)


def _build_call(M_pad, N_pad, K_pad, tm, tn, in_dtype, out_dtype,
                single_buffer_weights):
    def w_spec(shape, index_map):
        if single_buffer_weights:
            # Grid-invariant inputs: one resident VMEM buffer is enough.
            return pl.BlockSpec(shape, index_map, pipeline_mode=pl.Buffered(1))
        return pl.BlockSpec(shape, index_map)

    in_bytes = jnp.dtype(in_dtype).itemsize
    out_bytes = jnp.dtype(out_dtype).itemsize
    cost = pl.CostEstimate(
        flops=2 * M_pad * K_pad * N_pad,
        transcendentals=0,
        bytes_accessed=(M_pad * K_pad * in_bytes        # activations
                        + K_pad * N_pad * in_bytes      # fused weight
                        + N_pad * 4                     # fused bias (f32)
                        + M_pad * N_pad * out_bytes),   # output
    )

    return pl.pallas_call(
        attention_out_kernel,
        out_shape=jax.ShapeDtypeStruct((M_pad, N_pad), out_dtype),
        grid_spec=pltpu.PrefetchScalarGridSpec(
            num_scalar_prefetch=0,
            grid=(M_pad // tm, N_pad // tn),
            in_specs=[
                pl.BlockSpec((tm, K_pad), lambda i, j: (i, 0)),   # activation rows
                w_spec((K_pad, tn), lambda i, j: (0, j)),         # fused weight
                w_spec((1, tn), lambda i, j: (0, j)),             # fused bias
            ],
            out_specs=pl.BlockSpec((tm, tn), lambda i, j: (i, j)),
        ),
        compiler_params=pltpu.CompilerParams(
            dimension_semantics=("parallel", "parallel"),
            vmem_limit_bytes=64 * 1024 * 1024,
        ),
        cost_estimate=cost,
    )


def attention_out(input_tensor, hidden_states, w_dense, b_dense, w_in, b_in,
                  *, tm=256, tn=512, compute_dtype=None):
    """input_tensor: (..., d_in), hidden_states: (..., d_model) -> (..., d_model).

    Weights are stored pre-transposed relative to nn.Linear, i.e. shape
    (in_features, out_features).  Set compute_dtype=jnp.bfloat16 to cast the
    matmul inputs (accumulation stays f32; bias add stays f32).
    """
    d_in = input_tensor.shape[-1]
    d_model = hidden_states.shape[-1]
    lead = hidden_states.shape[:-1]
    M = int(math.prod(lead)) if lead else 1
    out_dtype = hidden_states.dtype

    # ---- fuse the two linears in the wrapper (one-time, cheap) --------------
    h2 = hidden_states.reshape(M, d_model)
    x2 = input_tensor.reshape(M, d_in)
    a = jnp.concatenate([h2, x2], axis=-1)                       # (M, K)
    w = jnp.concatenate([w_dense, w_in], axis=0)                 # (K, d_model)
    b = b_dense.astype(jnp.float32) + b_in.astype(jnp.float32)   # (d_model,)

    if compute_dtype is not None:          # e.g. jnp.bfloat16 on v5e/v6e/v7x
        a = a.astype(compute_dtype)
        w = w.astype(compute_dtype)
    in_dtype = a.dtype

    # ---- pad to TPU-friendly tiles instead of asserting ----------------------
    K = d_model + d_in
    sub = 8 if jnp.dtype(in_dtype).itemsize == 4 else 16   # f32 / bf16 sublane
    tm = max(sub, (tm // sub) * sub)
    tn = max(128, (tn // 128) * 128)

    K_pad = _round_up(K, 128)          # lane-dense activation loads
    N_pad = _round_up(d_model, 128)    # lane-dense output stores
    M_r = _round_up(M, sub)
    tm_eff = min(tm, M_r)
    M_pad = _round_up(M, tm_eff)

    if N_pad <= tn:
        tn_eff = N_pad
    else:
        # Largest multiple of 128 that is <= tn and divides N_pad (128 always works).
        tn_eff = max(d for d in range(128, tn + 1, 128) if N_pad % d == 0)

    if K_pad != K:
        a = jnp.pad(a, ((0, 0), (0, K_pad - K)))
        w = jnp.pad(w, ((0, K_pad - K), (0, 0)))
    if M_pad != M:
        a = jnp.pad(a, ((0, M_pad - M), (0, 0)))
    if N_pad != d_model:
        w = jnp.pad(w, ((0, 0), (0, N_pad - d_model)))
        b = jnp.pad(b, (0, N_pad - d_model))
    b2 = b.reshape(1, N_pad)

    # Weight/bias index maps are constant only when N is not tiled.
    weights_invariant = (tn_eff == N_pad)

    def run(single_buffer):
        call = _build_call(M_pad, N_pad, K_pad, tm_eff, tn_eff,
                           in_dtype, out_dtype, single_buffer)
        return jax.block_until_ready(call(a, w, b2))

    if weights_invariant:
        try:
            out = run(True)
        except Exception:
            # Fallback if this JAX build rejects pipeline_mode=pl.Buffered(1).
            out = run(False)
    else:
        out = run(False)

    out = out[:M, :d_model]
    return out.reshape(*lead, d_model)


def init_linear_params(key, in_features, out_features, dtype=jnp.float32):
    """Deterministic init matching nn.Linear's U(-1/sqrt(fan_in), 1/sqrt(fan_in)).
    Returns weight already transposed to (in_features, out_features)."""
    kw, kb = jax.random.split(key)
    bound = 1.0 / math.sqrt(in_features)
    w = jax.random.uniform(kw, (in_features, out_features), dtype, -bound, bound)
    b = jax.random.uniform(kb, (out_features,), dtype, -bound, bound)
    return w, b


if __name__ == "__main__":
    batch, seq = 2, 8
    d_in, d_model = 32, 64

    key = jax.random.PRNGKey(0)
    k_x, k_h, k_d, k_di = jax.random.split(key, 4)

    input_tensor = jax.random.normal(k_x, (batch, seq, d_in), jnp.float32)
    hidden_states = jax.random.normal(k_h, (batch, seq, d_model), jnp.float32)

    w_dense, b_dense = init_linear_params(k_d, d_model, d_model)   # self.dense
    w_in, b_in = init_linear_params(k_di, d_in, d_model)           # self.dense_input

    out = attention_out(input_tensor, hidden_states, w_dense, b_dense, w_in, b_in)
    out = jax.block_until_ready(out)

    # Pure-JAX reference of the same semantics (dropout is inactive in forward).
    ref = hidden_states @ w_dense + b_dense + input_tensor @ w_in + b_in
    assert out.shape == (batch, seq, d_model)
    assert jnp.allclose(out, ref, atol=1e-5, rtol=1e-5)

    print("KERNEL_OK")
</pallas_src>

<mosaic_0001>
module attributes {stable_mosaic.version = 11 : i64} {
  func.func @attention_out_kernel(%arg0: i32, %arg1: i32, %arg2: memref<16x128xf32, #tpu.memory_space<vmem>>, %arg3: memref<128x128xf32, #tpu.memory_space<vmem>>, %arg4: memref<1x128xf32, #tpu.memory_space<vmem>>, %arg5: memref<16x128xf32, #tpu.memory_space<vmem>>) attributes {dimension_semantics = [#tpu.dimension_semantics<parallel>, #tpu.dimension_semantics<parallel>], iteration_bounds = array<i64: 1, 1>, scalar_prefetch = 0 : i64, scratch_operands = 0 : i64, tpu.core_type = #tpu.core_type<tc>, window_params = [{transform_indices = @transform_0, window_bounds = array<i64: 16, 128>}, {pipeline_mode = #tpu.pipeline_mode<synchronous>, transform_indices = @transform_1, window_bounds = array<i64: 128, 128>}, {pipeline_mode = #tpu.pipeline_mode<synchronous>, transform_indices = @transform_2, window_bounds = array<i64: 1, 128>}, {transform_indices = @transform_3, window_bounds = array<i64: 16, 128>}]} {
    %c0 = arith.constant 0 : index
    %c0_0 = arith.constant 0 : index
    %0 = vector.load %arg2[%c0, %c0_0] : memref<16x128xf32, #tpu.memory_space<vmem>>, vector<16x128xf32>
    %c0_1 = arith.constant 0 : index
    %c0_2 = arith.constant 0 : index
    %1 = vector.load %arg3[%c0_1, %c0_2] : memref<128x128xf32, #tpu.memory_space<vmem>>, vector<128x128xf32>
    %cst = arith.constant dense<0.000000e+00> : vector<16x128xf32>
    %2 = tpu.matmul %0, %1, %cst {dimension_numbers = #tpu.dot_dimension_numbers<[1], [0], [0], [1], [0, 0, 1, 1], [], []>} : vector<16x128xf32>, vector<128x128xf32>, vector<16x128xf32> -> vector<16x128xf32>
    %c0_3 = arith.constant 0 : index
    %c0_4 = arith.constant 0 : index
    %3 = vector.load %arg4[%c0_3, %c0_4] : memref<1x128xf32, #tpu.memory_space<vmem>>, vector<1x128xf32>
    %4 = vector.broadcast %3 : vector<1x128xf32> to vector<16x128xf32>
    %5 = arith.addf %2, %4 : vector<16x128xf32>
    %c0_5 = arith.constant 0 : index
    %c0_6 = arith.constant 0 : index
    %6 = vector.load %arg5[%c0_5, %c0_6] : memref<16x128xf32, #tpu.memory_space<vmem>>, vector<16x128xf32>
    tpu.vector_store %arg5[%c0_5, %c0_6], %5 {strides = array<i32>} : memref<16x128xf32, #tpu.memory_space<vmem>>, vector<16x128xf32>,
    return
  }
  func.func @transform_0(%arg0: i32, %arg1: i32) -> (i32, i32) {
    %c0_i32 = arith.constant 0 : i32
    %c0_i32_0 = arith.constant 0 : i32
    return %arg0, %c0_i32 : i32, i32
  }
  func.func @transform_1(%arg0: i32, %arg1: i32) -> (i32, i32) {
    %c0_i32 = arith.constant 0 : i32
    %c0_i32_0 = arith.constant 0 : i32
    return %c0_i32, %arg1 : i32, i32
  }
  func.func @transform_2(%arg0: i32, %arg1: i32) -> (i32, i32) {
    %c0_i32 = arith.constant 0 : i32
    %c0_i32_0 = arith.constant 0 : i32
    return %c0_i32, %arg1 : i32, i32
  }
  func.func @transform_3(%arg0: i32, %arg1: i32) -> (i32, i32) {
    %c0_i32 = arith.constant 0 : i32
    return %arg0, %arg1 : i32, i32
  }
}

module attributes {stable_mosaic.version = 11 : i64} {
  func.func @attention_out_kernel(%arg0: i32, %arg1: i32, %arg2: memref<16x128xf32, #tpu.memory_space<vmem>>, %arg3: memref<128x128xf32, #tpu.memory_space<vmem>>, %arg4: memref<1x128xf32, #tpu.memory_space<vmem>>, %arg5: memref<16x128xf32, #tpu.memory_space<vmem>>) attributes {dimension_semantics = [#tpu.dimension_semantics<parallel>, #tpu.dimension_semantics<parallel>], iteration_bounds = array<i64: 1, 1>, scalar_prefetch = 0 : i64, scratch_operands = 0 : i64, tpu.core_type = #tpu.core_type<tc>, window_params = [{transform_indices = @transform_0, window_bounds = array<i64: 16, 128>}, {transform_indices = @transform_1, window_bounds = array<i64: 128, 128>}, {transform_indices = @transform_2, window_bounds = array<i64: 1, 128>}, {transform_indices = @transform_3, window_bounds = array<i64: 16, 128>}]} {
    %c0 = arith.constant 0 : index
    %c0_0 = arith.constant 0 : index
    %0 = vector.load %arg2[%c0, %c0_0] : memref<16x128xf32, #tpu.memory_space<vmem>>, vector<16x128xf32>
    %c0_1 = arith.constant 0 : index
    %c0_2 = arith.constant 0 : index
    %1 = vector.load %arg3[%c0_1, %c0_2] : memref<128x128xf32, #tpu.memory_space<vmem>>, vector<128x128xf32>
    %cst = arith.constant dense<0.000000e+00> : vector<16x128xf32>
    %2 = tpu.matmul %0, %1, %cst {dimension_numbers = #tpu.dot_dimension_numbers<[1], [0], [0], [1], [0, 0, 1, 1], [], []>} : vector<16x128xf32>, vector<128x128xf32>, vector<16x128xf32> -> vector<16x128xf32>
    %c0_3 = arith.constant 0 : index
    %c0_4 = arith.constant 0 : index
    %3 = vector.load %arg4[%c0_3, %c0_4] : memref<1x128xf32, #tpu.memory_space<vmem>>, vector<1x128xf32>
    %4 = vector.broadcast %3 : vector<1x128xf32> to vector<16x128xf32>
    %5 = arith.addf %2, %4 : vector<16x128xf32>
    %c0_5 = arith.constant 0 : index
    %c0_6 = arith.constant 0 : index
    %6 = vector.load %arg5[%c0_5, %c0_6] : memref<16x128xf32, #tpu.memory_space<vmem>>, vector<16x128xf32>
    tpu.vector_store %arg5[%c0_5, %c0_6], %5 {strides = array<i32>} : memref<16x128xf32, #tpu.memory_space<vmem>>, vector<16x128xf32>,
    return
  }
  func.func @transform_0(%arg0: i32, %arg1: i32) -> (i32, i32) {
    %c0_i32 = arith.constant 0 : i32
    %c0_i32_0 = arith.constant 0 : i32
    return %arg0, %c0_i32 : i32, i32
  }
  func.func @transform_1(%arg0: i32, %arg1: i32) -> (i32, i32) {
    %c0_i32 = arith.constant 0 : i32
    %c0_i32_0 = arith.constant 0 : i32
    return %c0_i32, %arg1 : i32, i32
  }
  func.func @transform_2(%arg0: i32, %arg1: i32) -> (i32, i32) {
    %c0_i32 = arith.constant 0 : i32
    %c0_i32_0 = arith.constant 0 : i32
    return %c0_i32, %arg1 : i32, i32
  }
  func.func @transform_3(%arg0: i32, %arg1: i32) -> (i32, i32) {
    %c0_i32 = arith.constant 0 : i32
    return %arg0, %arg1 : i32, i32
  }
}

</mosaic_0001>

<llo_original>
// kernel: tpu_custom_call.1
$region0: #{tpu_custom_call.1}
  #allocation0 [shape = 'u32[]', space=smem, size = 0x4, offset = 0x4, fixed_abs, tag = 'smem constant byte address 0x4 - core index']
  #allocation1 [shape = 'u32[72,128]{1,0:T(1,128)}', space=vmem, size = 0x9000, scoped, tag = 'internal scratch']
  %s0 = inlined_call_operand.hbm [shape: f32[16,128], index: 0, kind: input, shape index: {}]
  %s1 = inlined_call_operand.hbm [shape: f32[128,128], index: 1, kind: input, shape index: {}]
  %s2 = inlined_call_operand.vmem [shape: f32[1,128], index: 2, kind: input, shape index: {}]
  %s3 = inlined_call_operand.hbm [shape: f32[16,128], index: 3, kind: output, shape index: {}]
  %s4 = sld [smem:[#allocation0]]
  $region30: #{tpu_custom_call.1} parent=0
    _
  %s6 = ssub.s32 1, %s4
  %s7 = scalar_select 0, %s6, %s4
  $region1: #{tpu_custom_call.1} parent=0
    #allocation2 [shape = 'u8[8192]{0}', space=vmem, size = 0x2000, scoped, tag = 'input window, operand 0, single buffered']
    #allocation3 [shape = 's32[1]{0}', space=sflag, size = 0x4, scoped, tag = 'scoped memory for tpu_custom_call.1']
    #allocation4 [shape = 's32[1]{0}', space=sflag, size = 0x4, scoped, tag = 'scoped memory for tpu_custom_call.1']
    #allocation5 [shape = 'u8[65536]{0}', space=vmem, size = 0x10000, scoped, tag = 'input window, operand 1, single buffered']
    #allocation6 [shape = 's32[1]{0}', space=sflag, size = 0x4, scoped, tag = 'scoped memory for tpu_custom_call.1']
    #allocation7 [shape = 'u8[8192]{0}', space=vmem, size = 0x2000, scoped, tag = 'output window, operand 0, single buffered']
    %8 = vsyncpa [#allocation3], 0
    %9 = vsyncpa [#allocation6], 0
    %10 = vsyncpa [#allocation4], 0
    // Predicated region
    $region2: #{tpu_custom_call.1} parent=1 // pred_check
      _
    $region3: #{tpu_custom_call.1} parent=1 // pred_check_branch
      %12 = sbr.rel (0) target = $region5
    $region4: #{tpu_custom_call.1} parent=1 // pred_region
      %14 = vsyncadd [#allocation3], 0
      %s15 = sshll.u32 %s0, 4
      %s16 = int_to_ptr.hbm [resolvable:$true] %s15
      %s17 = sshll.u32 [#allocation2], 4
      %s18 = int_to_ptr.vmem [resolvable:$true] %s17
      %23 = dma.hbm_to_vmem [thread:$0]  %s16, 256, %s18, [#allocation3], 128, 128, 8
    $region5: #{tpu_custom_call.1} parent=1 // pred_fallthru
      _
    // Predicated region
    $region6: #{tpu_custom_call.1} parent=1 // pred_check
      _
    $region7: #{tpu_custom_call.1} parent=1 // pred_check_branch
      %25 = sbr.rel (0) target = $region9
    $region8: #{tpu_custom_call.1} parent=1 // pred_region
      %27 = vsyncadd [#allocation6], 0
      %s28 = sshll.u32 %s1, 4
      %s29 = int_to_ptr.hbm [resolvable:$true] %s28
      %s30 = sshll.u32 [#allocation5], 4
      %s31 = int_to_ptr.vmem [resolvable:$true] %s30
      %36 = dma.hbm_to_vmem [thread:$0]  %s29, 2048, %s31, [#allocation6], 128, 128, 8
    $region9: #{tpu_custom_call.1} parent=1 // pred_fallthru
      _
    // Predicated region
    $region10: #{tpu_custom_call.1} parent=1 // pred_check
      _
    $region11: #{tpu_custom_call.1} parent=1 // pred_check_branch
      %38 = sbr.rel (0) target = $region13
    $region12: #{tpu_custom_call.1} parent=1 // pred_region
      _
    $region13: #{tpu_custom_call.1} parent=1 // pred_fallthru
      _
    // Predicated region
    $region14: #{tpu_custom_call.1} parent=1 // pred_check
      _
    $region15: #{tpu_custom_call.1} parent=1 // pred_check_branch
      %40 = sbr.rel (0) target = $region17
    $region16: #{tpu_custom_call.1} parent=1 // pred_region
      %42 = dma.done [#allocation3], 256
    $region17: #{tpu_custom_call.1} parent=1 // pred_fallthru
      _
    // Predicated region
    $region18: #{tpu_custom_call.1} parent=1 // pred_check
      _
    $region19: #{tpu_custom_call.1} parent=1 // pred_check_branch
      %44 = sbr.rel (0) target = $region21
    $region20: #{tpu_custom_call.1} parent=1 // pred_region
      %46 = dma.done [#allocation6], 2048
    $region21: #{tpu_custom_call.1} parent=1 // pred_fallthru
      _
    %v47 = vld [vmem:[#allocation2] sm:$0xff]
    %v48 = vld [vmem:[#allocation2 + $0x8] sm:$0xff]
    %v49 = vld [vmem:[#allocation5] sm:$0xff]
    %v50 = vld [vmem:[#allocation5 + $0x8] sm:$0xff]
    %v51 = vld [vmem:[#allocation5 + $0x10] sm:$0xff]
    %v52 = vld [vmem:[#allocation5 + $0x18] sm:$0xff]
    %v53 = vld [vmem:[#allocation5 + $0x20] sm:$0xff]
    %v54 = vld [vmem:[#allocation5 + $0x28] sm:$0xff]
    %v55 = vld [vmem:[#allocation5 + $0x30] sm:$0xff]
    %v56 = vld [vmem:[#allocation5 + $0x38] sm:$0xff]
    %v57 = vld [vmem:[#allocation5 + $0x40] sm:$0xff]
    %v58 = vld [vmem:[#allocation5 + $0x48] sm:$0xff]
    %v59 = vld [vmem:[#allocation5 + $0x50] sm:$0xff]
    %v60 = vld [vmem:[#allocation5 + $0x58] sm:$0xff]
    %v61 = vld [vmem:[#allocation5 + $0x60] sm:$0xff]
    %v62 = vld [vmem:[#allocation5 + $0x68] sm:$0xff]
    %v63 = vld [vmem:[#allocation5 + $0x70] sm:$0xff]
    %v64 = vld [vmem:[#allocation5 + $0x78] sm:$0xff]
    %v65 = vld [vmem:[%s2] sm:$0x1]
    %v67 = vperm.slane %v65, 0
    %69 = vmatpush.msra.mxu0 %v64
    %70 = vmatpush.msra.mxu0 %v63
    %71 = vmatpush.msra.mxu0 %v62
    %72 = vmatpush.msra.mxu0 %v61
    %73 = vmatpush.msra.mxu0 %v60
    %74 = vmatpush.msra.mxu0 %v59
    %75 = vmatpush.msra.mxu0 %v58
    %76 = vmatpush.msra.mxu0 %v57
    %77 = vmatpush.msra.mxu0 %v56
    %78 = vmatpush.msra.mxu0 %v55
    %79 = vmatpush.msra.mxu0 %v54
    %80 = vmatpush.msra.mxu0 %v53
    %81 = vmatpush.msra.mxu0 %v52
    %82 = vmatpush.msra.mxu0 %v51
    %83 = vmatpush.msra.mxu0 %v50
    %84 = vmatpush.msra.mxu0 %v49
    %85 = vmatmul.f32.gmra.mxu0 %v47
    %v86 = vpop.f32.mrf.mxu0
    %v87 = vadd.f32 %v67, %v86
    %88 = vmatmul.f32.gmra.mxu0 %v48
    %v89 = vpop.f32.mrf.mxu0
    %v90 = vadd.f32 %v67, %v89
    %91 = vdwg.mxu0
    %92 = vst [vmem:[#allocation7] sm:$0xff] %v87
    %93 = vst [vmem:[#allocation7 + $0x8] sm:$0xff] %v90
    // Predicated region
    $region22: #{tpu_custom_call.1} parent=1 // pred_check
      _
    $region23: #{tpu_custom_call.1} parent=1 // pred_check_branch
      %95 = sbr.rel (0) target = $region25
    $region24: #{tpu_custom_call.1} parent=1 // pred_region
      %97 = vsyncadd [#allocation4], 0
      %s98 = sshll.u32 [#allocation7], 4
      %s99 = int_to_ptr.vmem [resolvable:$true] %s98
      %s100 = sshll.u32 %s3, 4
      %s101 = int_to_ptr.hbm [resolvable:$true] %s100
      %106 = dma.vmem_to_hbm [thread:$0]  %s99, 256, %s101, [#allocation4], 128, 128, 8
    $region25: #{tpu_custom_call.1} parent=1 // pred_fallthru
      _
    // Predicated region
    $region26: #{tpu_custom_call.1} parent=1 // pred_check
      _
    $region27: #{tpu_custom_call.1} parent=1 // pred_check_branch
      %108 = sbr.rel (0) target = $region29
    $region28: #{tpu_custom_call.1} parent=1 // pred_region
      %110 = dma.done [#allocation4], 256
    $region29: #{tpu_custom_call.1} parent=1 // pred_fallthru
      _
    %111 = vsyncpa [#allocation3], 1
    %112 = vsyncpa [#allocation6], 1
    %113 = vsyncpa [#allocation4], 1

// kernel: tpu_custom_call.1
$region0: #{tpu_custom_call.1}
  #allocation0 [shape = 'u32[]', space=smem, size = 0x4, offset = 0x4, fixed_abs, tag = 'smem constant byte address 0x4 - core index']
  #allocation1 [shape = 'u32[72,128]{1,0:T(1,128)}', space=vmem, size = 0x9000, scoped, tag = 'internal scratch']
  %s0 = inlined_call_operand.hbm [shape: f32[16,128], index: 0, kind: input, shape index: {}]
  %s1 = inlined_call_operand.hbm [shape: f32[128,128], index: 1, kind: input, shape index: {}]
  %s2 = inlined_call_operand.vmem [shape: f32[1,128], index: 2, kind: input, shape index: {}]
  %s3 = inlined_call_operand.hbm [shape: f32[16,128], index: 3, kind: output, shape index: {}]
  %s4 = sld [smem:[#allocation0]]
  $region30: #{tpu_custom_call.1} parent=0
    _
  %s6 = ssub.s32 1, %s4
  %s7 = scalar_select 0, %s6, %s4
  $region1: #{tpu_custom_call.1} parent=0
    #allocation2 [shape = 'u8[8192]{0}', space=vmem, size = 0x2000, scoped, tag = 'input window, operand 0, single buffered']
    #allocation3 [shape = 's32[1]{0}', space=sflag, size = 0x4, scoped, tag = 'scoped memory for tpu_custom_call.1']
    #allocation4 [shape = 's32[1]{0}', space=sflag, size = 0x4, scoped, tag = 'scoped memory for tpu_custom_call.1']
    #allocation5 [shape = 'u8[65536]{0}', space=vmem, size = 0x10000, scoped, tag = 'input window, operand 1, single buffered']
    #allocation6 [shape = 's32[1]{0}', space=sflag, size = 0x4, scoped, tag = 'scoped memory for tpu_custom_call.1']
    #allocation7 [shape = 'u8[8192]{0}', space=vmem, size = 0x2000, scoped, tag = 'output window, operand 0, single buffered']
    %8 = vsyncpa [#allocation3], 0
    %9 = vsyncpa [#allocation6], 0
    %10 = vsyncpa [#allocation4], 0
    // Predicated region
    $region2: #{tpu_custom_call.1} parent=1 // pred_check
      _
    $region3: #{tpu_custom_call.1} parent=1 // pred_check_branch
      %12 = sbr.rel (0) target = $region5
    $region4: #{tpu_custom_call.1} parent=1 // pred_region
      %14 = vsyncadd [#allocation3], 0
      %s15 = sshll.u32 %s0, 4
      %s16 = int_to_ptr.hbm [resolvable:$true] %s15
      %s17 = sshll.u32 [#allocation2], 4
      %s18 = int_to_ptr.vmem [resolvable:$true] %s17
      %23 = dma.hbm_to_vmem [thread:$0]  %s16, 256, %s18, [#allocation3], 128, 128, 8
    $region5: #{tpu_custom_call.1} parent=1 // pred_fallthru
      _
    // Predicated region
    $region6: #{tpu_custom_call.1} parent=1 // pred_check
      _
    $region7: #{tpu_custom_call.1} parent=1 // pred_check_branch
      %25 = sbr.rel (0) target = $region9
    $region8: #{tpu_custom_call.1} parent=1 // pred_region
      %27 = vsyncadd [#allocation6], 0
      %s28 = sshll.u32 %s1, 4
      %s29 = int_to_ptr.hbm [resolvable:$true] %s28
      %s30 = sshll.u32 [#allocation5], 4
      %s31 = int_to_ptr.vmem [resolvable:$true] %s30
      %36 = dma.hbm_to_vmem [thread:$0]  %s29, 2048, %s31, [#allocation6], 128, 128, 8
    $region9: #{tpu_custom_call.1} parent=1 // pred_fallthru
      _
    // Predicated region
    $region10: #{tpu_custom_call.1} parent=1 // pred_check
      _
    $region11: #{tpu_custom_call.1} parent=1 // pred_check_branch
      %38 = sbr.rel (0) target = $region13
    $region12: #{tpu_custom_call.1} parent=1 // pred_region
      _
    $region13: #{tpu_custom_call.1} parent=1 // pred_fallthru
      _
    // Predicated region
    $region14: #{tpu_custom_call.1} parent=1 // pred_check
      _
    $region15: #{tpu_custom_call.1} parent=1 // pred_check_branch
      %40 = sbr.rel (0) target = $region17
    $region16: #{tpu_custom_call.1} parent=1 // pred_region
      %42 = dma.done [#allocation3], 256
    $region17: #{tpu_custom_call.1} parent=1 // pred_fallthru
      _
    // Predicated region
    $region18: #{tpu_custom_call.1} parent=1 // pred_check
      _
    $region19: #{tpu_custom_call.1} parent=1 // pred_check_branch
      %44 = sbr.rel (0) target = $region21
    $region20: #{tpu_custom_call.1} parent=1 // pred_region
      %46 = dma.done [#allocation6], 2048
    $region21: #{tpu_custom_call.1} parent=1 // pred_fallthru
      _
    %v47 = vld [vmem:[#allocation2] sm:$0xff]
    %v48 = vld [vmem:[#allocation2 + $0x8] sm:$0xff]
    %v49 = vld [vmem:[#allocation5] sm:$0xff]
    %v50 = vld [vmem:[#allocation5 + $0x8] sm:$0xff]
    %v51 = vld [vmem:[#allocation5 + $0x10] sm:$0xff]
    %v52 = vld [vmem:[#allocation5 + $0x18] sm:$0xff]
    %v53 = vld [vmem:[#allocation5 + $0x20] sm:$0xff]
    %v54 = vld [vmem:[#allocation5 + $0x28] sm:$0xff]
    %v55 = vld [vmem:[#allocation5 + $0x30] sm:$0xff]
    %v56 = vld [vmem:[#allocation5 + $0x38] sm:$0xff]
    %v57 = vld [vmem:[#allocation5 + $0x40] sm:$0xff]
    %v58 = vld [vmem:[#allocation5 + $0x48] sm:$0xff]
    %v59 = vld [vmem:[#allocation5 + $0x50] sm:$0xff]
    %v60 = vld [vmem:[#allocation5 + $0x58] sm:$0xff]
    %v61 = vld [vmem:[#allocation5 + $0x60] sm:$0xff]
    %v62 = vld [vmem:[#allocation5 + $0x68] sm:$0xff]
    %v63 = vld [vmem:[#allocation5 + $0x70] sm:$0xff]
    %v64 = vld [vmem:[#allocation5 + $0x78] sm:$0xff]
    %v65 = vld [vmem:[%s2] sm:$0x1]
    %v67 = vperm.slane %v65, 0
    %69 = vmatpush.msra.mxu0 %v64
    %70 = vmatpush.msra.mxu0 %v63
    %71 = vmatpush.msra.mxu0 %v62
    %72 = vmatpush.msra.mxu0 %v61
    %73 = vmatpush.msra.mxu0 %v60
    %74 = vmatpush.msra.mxu0 %v59
    %75 = vmatpush.msra.mxu0 %v58
    %76 = vmatpush.msra.mxu0 %v57
    %77 = vmatpush.msra.mxu0 %v56
    %78 = vmatpush.msra.mxu0 %v55
    %79 = vmatpush.msra.mxu0 %v54
    %80 = vmatpush.msra.mxu0 %v53
    %81 = vmatpush.msra.mxu0 %v52
    %82 = vmatpush.msra.mxu0 %v51
    %83 = vmatpush.msra.mxu0 %v50
    %84 = vmatpush.msra.mxu0 %v49
    %85 = vmatmul.f32.gmra.mxu0 %v47
    %v86 = vpop.f32.mrf.mxu0
    %v87 = vadd.f32 %v67, %v86
    %88 = vmatmul.f32.gmra.mxu0 %v48
    %v89 = vpop.f32.mrf.mxu0
    %v90 = vadd.f32 %v67, %v89
    %91 = vdwg.mxu0
    %92 = vst [vmem:[#allocation7] sm:$0xff] %v87
    %93 = vst [vmem:[#allocation7 + $0x8] sm:$0xff] %v90
    // Predicated region
    $region22: #{tpu_custom_call.1} parent=1 // pred_check
      _
    $region23: #{tpu_custom_call.1} parent=1 // pred_check_branch
      %95 = sbr.rel (0) target = $region25
    $region24: #{tpu_custom_call.1} parent=1 // pred_region
      %97 = vsyncadd [#allocation4], 0
      %s98 = sshll.u32 [#allocation7], 4
      %s99 = int_to_ptr.vmem [resolvable:$true] %s98
      %s100 = sshll.u32 %s3, 4
      %s101 = int_to_ptr.hbm [resolvable:$true] %s100
      %106 = dma.vmem_to_hbm [thread:$0]  %s99, 256, %s101, [#allocation4], 128, 128, 8
    $region25: #{tpu_custom_call.1} parent=1 // pred_fallthru
      _
    // Predicated region
    $region26: #{tpu_custom_call.1} parent=1 // pred_check
      _
    $region27: #{tpu_custom_call.1} parent=1 // pred_check_branch
      %108 = sbr.rel (0) target = $region29
    $region28: #{tpu_custom_call.1} parent=1 // pred_region
      %110 = dma.done [#allocation4], 256
    $region29: #{tpu_custom_call.1} parent=1 // pred_fallthru
      _
    %111 = vsyncpa [#allocation3], 1
    %112 = vsyncpa [#allocation6], 1
    %113 = vsyncpa [#allocation4], 1

</llo_original>
